<compile_context>
chip_gen: v7x
topology: tpu7x:2x2x1
jax: 0.10.0
libtpu: 0.0.40
codegen_flags: <defaults>
</compile_context>

<pallas_src>
import functools

import jax
import jax.numpy as jnp
from jax.experimental import pallas as pl
from jax.experimental.pallas import tpu as pltpu


def _se_kernel(x_ref, w1t_ref, w2_ref, o_ref, *, inv_hw):
    # x_ref:   (1, C, HW_pad)  one batch element (native dtype)
    # w1t_ref: (C, C_red_pad)  fc1 weight, pre-transposed in the wrapper
    # w2_ref:  (C, C_red_pad)  fc2 weight (PyTorch layout (C, C_red), padded)
    # o_ref:   (1, C, HW_pad)
    x = x_ref[0]                                                  # (C, HW_pad)

    # ---- global average pool (f32 accumulation, lane reduce) ----
    # Padded spatial columns are zero, so sum * (1/true_HW) == true mean.
    y = jnp.sum(x, axis=-1, keepdims=True, dtype=jnp.float32) * inv_hw   # (C, 1)

    # ---- fc1 (no bias) + ReLU: VPU broadcast-mul + sublane reduce ----
    # h[r] = sum_c W1[r, c] * y[c]
    h = jnp.sum(w1t_ref[...] * y, axis=0, keepdims=True)          # (1, C_red_pad)
    h = jnp.maximum(h, 0.0)

    # ---- fc2 (no bias) + Hsigmoid: VPU broadcast-mul + lane reduce ----
    # s[c] = sum_r W2[c, r] * h[r]
    s = jnp.sum(w2_ref[...] * h, axis=-1, keepdims=True)          # (C, 1)
    s = jnp.clip(s + 3.0, 0.0, 6.0) * (1.0 / 6.0)                 # relu6(x+3)/6

    # ---- channel-wise rescale of the input (native dtype) ----
    o_ref[0] = (x * s.astype(x.dtype)).astype(o_ref.dtype)


def se_module(x, w1, w2, *, donate_input=False):
    """SEModule forward.

    x:  (B, C, H, W)
    w1: (C // reduction, C)   -- fc1 Linear weight (PyTorch (out, in) layout)
    w2: (C, C // reduction)   -- fc2 Linear weight
    """
    B, C, H, W = x.shape
    HW = H * W
    HW_pad = ((HW + 127) // 128) * 128
    C_red = w1.shape[0]
    C_red_pad = ((C_red + 7) // 8) * 8

    x_flat = x.reshape(B, C, HW)
    if HW_pad != HW:
        x_flat = jnp.pad(x_flat, ((0, 0), (0, 0), (0, HW_pad - HW)))

    # Prepare weights once in the wrapper so the kernel never transposes:
    #   w1t: (C, C_red_pad) = fc1 weight transposed, zero-padded columns
    #   w2p: (C, C_red_pad) = fc2 weight, zero-padded columns
    # Zero padding contributes exactly 0 through relu/fc2, so results match.
    w1t = jnp.zeros((C, C_red_pad), w1.dtype).at[:, :C_red].set(w1.T)
    w2p = jnp.zeros((C, C_red_pad), w2.dtype).at[:, :C_red].set(w2)

    # Explicit VMEM budget: double-buffered input block + output block + weights.
    block_bytes = C * HW_pad * x.dtype.itemsize
    w_bytes = (w1t.size * w1t.dtype.itemsize) + (w2p.size * w2p.dtype.itemsize)
    vmem_needed = 4 * block_bytes + 4 * w_bytes + (1 << 20)
    vmem_limit = int(min(max(vmem_needed, 32 << 20), 100 << 20))
    # TODO(synk): for very large C*HW (approaching half of v7x's 64 MiB VMEM),
    # switch to a two-pass HW-tiled grid (pool pass into scratch, then rescale).
    # TODO(synk): for B == 1 on v7x, add a second parallel grid axis so both
    # TensorCores get work.

    kernel = functools.partial(_se_kernel, inv_hw=1.0 / HW)

    out = pl.pallas_call(
        kernel,
        out_shape=jax.ShapeDtypeStruct((B, C, HW_pad), x.dtype),
        grid_spec=pltpu.PrefetchScalarGridSpec(
            num_scalar_prefetch=0,
            grid=(B,),
            in_specs=[
                pl.BlockSpec((1, C, HW_pad), lambda b: (b, 0, 0)),
                pl.BlockSpec((C, C_red_pad), lambda b: (0, 0)),
                pl.BlockSpec((C, C_red_pad), lambda b: (0, 0)),
            ],
            out_specs=pl.BlockSpec((1, C, HW_pad), lambda b: (b, 0, 0)),
        ),
        compiler_params=pltpu.CompilerParams(
            dimension_semantics=("parallel",),
            vmem_limit_bytes=vmem_limit,
        ),
        # Alias x_flat -> out when the caller no longer needs x (saves an HBM
        # output allocation; XLA copies if x is still live, so it is safe).
        input_output_aliases=({0: 0} if donate_input else {}),
    )(x_flat, w1t, w2p)

    if HW_pad != HW:
        out = out[:, :, :HW]
    return out.reshape(B, C, H, W)


def se_module_ref(x, w1, w2):
    """Pure-JAX reference matching the PyTorch forward."""
    y = jnp.mean(x, axis=(2, 3))                     # adaptive avg pool -> (B, C)
    y = jnp.maximum(y @ w1.T, 0.0)                   # fc1 + ReLU
    y = y @ w2.T                                     # fc2
    y = jnp.clip(y + 3.0, 0.0, 6.0) / 6.0            # Hsigmoid
    return x * y[:, :, None, None]


if __name__ == "__main__":
    # SEModule(channel=8, reduction=4)
    B, C, H, W = 2, 8, 16, 16
    reduction = 4
    C_red = C // reduction

    key = jax.random.PRNGKey(0)
    kx, k1, k2 = jax.random.split(key, 3)
    x = jax.random.normal(kx, (B, C, H, W), dtype=jnp.float32)
    # Deterministic synthetic Linear weights (PyTorch layout (out, in)).
    w1 = jax.random.normal(k1, (C_red, C), dtype=jnp.float32) * 0.1
    w2 = jax.random.normal(k2, (C, C_red), dtype=jnp.float32) * 0.1

    out = jax.block_until_ready(se_module(x, w1, w2))
    ref = se_module_ref(x, w1, w2)
    assert out.shape == (B, C, H, W)
    assert jnp.allclose(out, ref, atol=1e-5, rtol=1e-5), "mismatch vs reference"

    # Exercise the non-lane-multiple spatial path (HW = 49 -> padded to 128).
    x2 = jax.random.normal(kx, (B, C, 7, 7), dtype=jnp.float32)
    out2 = jax.block_until_ready(se_module(x2, w1, w2))
    ref2 = se_module_ref(x2, w1, w2)
    assert jnp.allclose(out2, ref2, atol=1e-5, rtol=1e-5), "mismatch (padded HW)"

    print("KERNEL_OK")
</pallas_src>

<mosaic_0001>
module attributes {stable_mosaic.version = 11 : i64} {
  func.func @_se_kernel(%arg0: i32, %arg1: memref<1x8x256xf32, #tpu.memory_space<vmem>>, %arg2: memref<8x8xf32, #tpu.memory_space<vmem>>, %arg3: memref<8x8xf32, #tpu.memory_space<vmem>>, %arg4: memref<1x8x256xf32, #tpu.memory_space<vmem>>) attributes {dimension_semantics = [#tpu.dimension_semantics<parallel>], iteration_bounds = array<i64: 2>, scalar_prefetch = 0 : i64, scratch_operands = 0 : i64, tpu.core_type = #tpu.core_type<tc>, window_params = [{transform_indices = @transform_0, window_bounds = array<i64: 1, 8, 256>}, {pipeline_mode = #tpu.pipeline_mode<synchronous>, transform_indices = @transform_1, window_bounds = array<i64: 8, 8>}, {pipeline_mode = #tpu.pipeline_mode<synchronous>, transform_indices = @transform_2, window_bounds = array<i64: 8, 8>}, {transform_indices = @transform_3, window_bounds = array<i64: 1, 8, 256>}]} {
    %c0 = arith.constant 0 : index
    %c0_0 = arith.constant 0 : index
    %c0_1 = arith.constant 0 : index
    %0 = vector.load %arg1[%c0, %c0_0, %c0_1] : memref<1x8x256xf32, #tpu.memory_space<vmem>>, vector<1x8x256xf32>
    %1 = vector.shape_cast %0 : vector<1x8x256xf32> to vector<8x256xf32>
    %cst = arith.constant dense<0.000000e+00> : vector<8xf32>
    %2 = vector.multi_reduction <add>, %1, %cst [1] : vector<8x256xf32> to vector<8xf32>
    %3 = vector.shape_cast %2 : vector<8xf32> to vector<8x1xf32>
    %cst_2 = arith.constant 3.906250e-03 : f32
    %4 = vector.broadcast %cst_2 : f32 to vector<8x1xf32>
    %5 = arith.mulf %3, %4 : vector<8x1xf32>
    %c0_3 = arith.constant 0 : index
    %c0_4 = arith.constant 0 : index
    %6 = vector.load %arg2[%c0_3, %c0_4] : memref<8x8xf32, #tpu.memory_space<vmem>>, vector<8x8xf32>
    %7 = vector.broadcast %5 : vector<8x1xf32> to vector<8x8xf32>
    %8 = arith.mulf %6, %7 : vector<8x8xf32>
    %cst_5 = arith.constant dense<0.000000e+00> : vector<8xf32>
    %9 = vector.multi_reduction <add>, %8, %cst_5 [0] : vector<8x8xf32> to vector<8xf32>
    %10 = vector.shape_cast %9 : vector<8xf32> to vector<1x8xf32>
    %cst_6 = arith.constant 0.000000e+00 : f32
    %11 = vector.broadcast %cst_6 : f32 to vector<1x8xf32>
    %12 = arith.maximumf %10, %11 : vector<1x8xf32>
    %c0_7 = arith.constant 0 : index
    %c0_8 = arith.constant 0 : index
    %13 = vector.load %arg3[%c0_7, %c0_8] : memref<8x8xf32, #tpu.memory_space<vmem>>, vector<8x8xf32>
    %14 = vector.broadcast %12 : vector<1x8xf32> to vector<8x8xf32>
    %15 = arith.mulf %13, %14 : vector<8x8xf32>
    %cst_9 = arith.constant dense<0.000000e+00> : vector<8xf32>
    %16 = vector.multi_reduction <add>, %15, %cst_9 [1] : vector<8x8xf32> to vector<8xf32>
    %17 = vector.shape_cast %16 : vector<8xf32> to vector<8x1xf32>
    %cst_10 = arith.constant 3.000000e+00 : f32
    %18 = vector.broadcast %cst_10 : f32 to vector<8x1xf32>
    %19 = arith.addf %17, %18 : vector<8x1xf32>
    %cst_11 = arith.constant 0.000000e+00 : f32
    %cst_12 = arith.constant 6.000000e+00 : f32
    %20 = vector.broadcast %cst_11 : f32 to vector<8x1xf32>
    %21 = arith.maximumf %20, %19 : vector<8x1xf32>
    %22 = vector.broadcast %cst_12 : f32 to vector<8x1xf32>
    %23 = arith.minimumf %22, %21 : vector<8x1xf32>
    %cst_13 = arith.constant 0.166666672 : f32
    %24 = vector.broadcast %cst_13 : f32 to vector<8x1xf32>
    %25 = arith.mulf %23, %24 : vector<8x1xf32>
    %26 = vector.broadcast %25 : vector<8x1xf32> to vector<8x256xf32>
    %27 = arith.mulf %1, %26 : vector<8x256xf32>
    %c0_14 = arith.constant 0 : index
    %c0_15 = arith.constant 0 : index
    %c0_16 = arith.constant 0 : index
    %28 = vector.load %arg4[%c0_14, %c0_15, %c0_16] : memref<1x8x256xf32, #tpu.memory_space<vmem>>, vector<1x8x256xf32>
    %29 = vector.shape_cast %28 : vector<1x8x256xf32> to vector<8x256xf32>
    %30 = vector.shape_cast %27 : vector<8x256xf32> to vector<1x8x256xf32>
    tpu.vector_store %arg4[%c0_14, %c0_15, %c0_16], %30 {strides = array<i32>} : memref<1x8x256xf32, #tpu.memory_space<vmem>>, vector<1x8x256xf32>,
    return
  }
  func.func @transform_0(%arg0: i32) -> (i32, i32, i32) {
    %c0_i32 = arith.constant 0 : i32
    %c0_i32_0 = arith.constant 0 : i32
    %c0_i32_1 = arith.constant 0 : i32
    return %arg0, %c0_i32, %c0_i32_0 : i32, i32, i32
  }
  func.func @transform_1(%arg0: i32) -> (i32, i32) {
    %c0_i32 = arith.constant 0 : i32
    %c0_i32_0 = arith.constant 0 : i32
    %c0_i32_1 = arith.constant 0 : i32
    return %c0_i32, %c0_i32_0 : i32, i32
  }
  func.func @transform_2(%arg0: i32) -> (i32, i32) {
    %c0_i32 = arith.constant 0 : i32
    %c0_i32_0 = arith.constant 0 : i32
    %c0_i32_1 = arith.constant 0 : i32
    return %c0_i32, %c0_i32_0 : i32, i32
  }
  func.func @transform_3(%arg0: i32) -> (i32, i32, i32) {
    %c0_i32 = arith.constant 0 : i32
    %c0_i32_0 = arith.constant 0 : i32
    %c0_i32_1 = arith.constant 0 : i32
    return %arg0, %c0_i32, %c0_i32_0 : i32, i32, i32
  }
}

</mosaic_0001>

<llo_original>
// kernel: tpu_custom_call.1
$region0: #{tpu_custom_call.1}
  #allocation0 [shape = 'u32[]', space=smem, size = 0x4, offset = 0x4, fixed_abs, tag = 'smem constant byte address 0x4 - core index']
  #allocation1 [shape = 'u32[144,128]{1,0:T(1,128)}', space=vmem, size = 0x12000, scoped, tag = 'internal scratch']
  %s0 = inlined_call_operand.hbm [shape: f32[2,8,256], index: 0, kind: input, shape index: {}]
  %s1 = inlined_call_operand.hbm [shape: f32[8,8], index: 1, kind: input, shape index: {}]
  %s2 = inlined_call_operand.hbm [shape: f32[8,8], index: 2, kind: input, shape index: {}]
  %s3 = inlined_call_operand.hbm [shape: f32[2,8,256], index: 3, kind: output, shape index: {}]
  %s4 = sld [smem:[#allocation0]]
  $region57: #{tpu_custom_call.1} parent=0
    _
  %s6 = ssub.s32 1, %s4
  %s7 = scalar_select 0, %s6, %s4
  $region1: #{tpu_custom_call.1} parent=0
    #allocation2 [shape = 'u8[16384]{0}', space=vmem, size = 0x4000, scoped, tag = 'input window, operand 0']
    #allocation3 [shape = 's32[2]{0}', space=sflag, size = 0x8, scoped, tag = 'scoped memory for tpu_custom_call.1']
    #allocation4 [shape = 's32[2]{0}', space=sflag, size = 0x8, scoped, tag = 'scoped memory for tpu_custom_call.1']
    #allocation5 [shape = 'u8[4096]{0}', space=vmem, size = 0x1000, scoped, tag = 'input window, operand 1, single buffered']
    #allocation6 [shape = 's32[1]{0}', space=sflag, size = 0x4, scoped, tag = 'scoped memory for tpu_custom_call.1']
    #allocation7 [shape = 'u8[4096]{0}', space=vmem, size = 0x1000, scoped, tag = 'input window, operand 2, single buffered']
    #allocation8 [shape = 'u8[16384]{0}', space=vmem, size = 0x4000, scoped, tag = 'output window, operand 0']
    %8 = vsyncpa [#allocation3], 0
    %s9 = scalar_lea.sflag [#allocation3], 1
    %10 = vsyncpa %s9, 0
    %11 = vsyncpa [#allocation6], 0
    %12 = vsyncpa [#allocation4], 0
    %s13 = scalar_lea.sflag [#allocation4], 1
    %14 = vsyncpa %s13, 0
    loop: start=0, step=1, limit=4
    $region2: #{tpu_custom_call.1} parent=1 // loop_pre_header
      _
    $region3: #{tpu_custom_call.1} parent=1 // loop_header
      %s16 = sphi 0, %s20
      %p17 = scmp.ge.s32.totalorder %s16, 4
      %s26 = sphi 0, %s28
      %s29 = sphi 0, %s26
      %s30 = sphi 0, %s29
      %s46 = sphi 0, %s30
      %s50 = sphi 0, %s50
      %s52 = sphi 0, %s50
      %s53 = sphi 0, %s52
      %s67 = sphi 0, %s53
      %s71 = sphi 0, %s71
      %s73 = sphi 0, %s71
      %s74 = sphi 0, %s73
      %s88 = sphi 0, %s74
      %s94 = sphi 0, %s96
      %s97 = sphi 0, %s94
      %s98 = sphi 0, %s97
      %s114 = sphi 0, %s98
    $region4: #{tpu_custom_call.1} parent=1 // loop_header_branch
      %19 = sbr.rel (%p17) target = $region8
    $region5: #{tpu_custom_call.1} parent=1 // loop_body
      %s21 = ssub.s32 %s16, 1
      %s22 = ssub.s32 %s16, 2
      %s23 = sadd.s32 %s16, 1
      %s24 = ssub.s32 %s16, %s23
      %p25 = scmp.eq.s32.totalorder %s24, 0
      %s27 = sadd.s32 %s26, 1
      %s28 = scalar_select %p25, %s26, %s27
      %p31 = pneg %p25
      %p32 = scmp.eq.s32.totalorder %s16, 1
      %p33 = por %p31, %p32
      %p34 = scmp.ne.s32.totalorder %s26, %s29
      %p35 = scmp.eq.s32.totalorder %s16, 0
      %p36 = por %p34, %p35
      %p37 = scmp.ne.s32.totalorder %s26, %s29
      %p38 = scmp.eq.s32.totalorder %s21, 1
      %p39 = por %p37, %p38
      %p40 = scmp.ne.s32.totalorder %s29, %s30
      %p41 = scmp.eq.s32.totalorder %s21, 0
      %p42 = por %p40, %p41
      %p43 = scmp.ne.s32.totalorder %s29, %s30
      %p44 = scmp.eq.s32.totalorder %s22, 1
      %p45 = por %p43, %p44
      %p47 = scmp.ne.s32.totalorder %s30, %s46
      %p48 = scmp.eq.s32.totalorder %s22, 0
      %p49 = por %p47, %p48
      %s51 = sadd.s32 %s50, 1
      %p54 = scmp.eq.s32.totalorder %s16, 1
      %p55 = scmp.ne.s32.totalorder %s50, %s52
      %p56 = scmp.eq.s32.totalorder %s16, 0
      %p57 = por %p55, %p56
      %p58 = scmp.ne.s32.totalorder %s50, %s52
      %p59 = scmp.eq.s32.totalorder %s21, 1
      %p60 = por %p58, %p59
      %p61 = scmp.ne.s32.totalorder %s52, %s53
      %p62 = scmp.eq.s32.totalorder %s21, 0
      %p63 = por %p61, %p62
      %p64 = scmp.ne.s32.totalorder %s52, %s53
      %p65 = scmp.eq.s32.totalorder %s22, 1
      %p66 = por %p64, %p65
      %p68 = scmp.ne.s32.totalorder %s53, %s67
      %p69 = scmp.eq.s32.totalorder %s22, 0
      %p70 = por %p68, %p69
      %s72 = sadd.s32 %s71, 1
      %p75 = scmp.eq.s32.totalorder %s16, 1
      %p76 = scmp.ne.s32.totalorder %s71, %s73
      %p77 = scmp.eq.s32.totalorder %s16, 0
      %p78 = por %p76, %p77
      %p79 = scmp.ne.s32.totalorder %s71, %s73
      %p80 = scmp.eq.s32.totalorder %s21, 1
      %p81 = por %p79, %p80
      %p82 = scmp.ne.s32.totalorder %s73, %s74
      %p83 = scmp.eq.s32.totalorder %s21, 0
      %p84 = por %p82, %p83
      %p85 = scmp.ne.s32.totalorder %s73, %s74
      %p86 = scmp.eq.s32.totalorder %s22, 1
      %p87 = por %p85, %p86
      %p89 = scmp.ne.s32.totalorder %s74, %s88
      %p90 = scmp.eq.s32.totalorder %s22, 0
      %p91 = por %p89, %p90
      %s92 = ssub.s32 %s16, %s23
      %p93 = scmp.eq.s32.totalorder %s92, 0
      %s95 = sadd.s32 %s94, 1
      %s96 = scalar_select %p93, %s94, %s95
      %p99 = pneg %p93
      %p100 = scmp.eq.s32.totalorder %s16, 1
      %p101 = por %p99, %p100
      %p102 = scmp.ne.s32.totalorder %s94, %s97
      %p103 = scmp.eq.s32.totalorder %s16, 0
      %p104 = por %p102, %p103
      %p105 = scmp.ne.s32.totalorder %s94, %s97
      %p106 = scmp.eq.s32.totalorder %s21, 1
      %p107 = por %p105, %p106
      %p108 = scmp.ne.s32.totalorder %s97, %s98
      %p109 = scmp.eq.s32.totalorder %s21, 0
      %p110 = por %p108, %p109
      %p111 = scmp.ne.s32.totalorder %s97, %s98
      %p112 = scmp.eq.s32.totalorder %s22, 1
      %p113 = por %p111, %p112
      %p115 = scmp.ne.s32.totalorder %s98, %s114
      %p116 = scmp.eq.s32.totalorder %s22, 0
      %p117 = por %p115, %p116
      %p118 = scmp.le.s32.totalorder 1, %s16
      %p119 = scmp.lt.s32.totalorder %s16, 3
      %p120 = pnand %p118, %p119
      %p121 = pneg %p120
      // Predicated region
      $region9: #{tpu_custom_call.1} parent=5 // pred_check
        _
      $region10: #{tpu_custom_call.1} parent=5 // pred_check_branch
        %123 = sbr.rel (%p120) target = $region12
      $region11: #{tpu_custom_call.1} parent=5 // pred_region
        %s124 = ssub.s32 %s16, 1
        // Predicated region
        $region13: #{tpu_custom_call.1} parent=11 // pred_check
          %p125 = pneg %p63
        $region14: #{tpu_custom_call.1} parent=11 // pred_check_branch
          %127 = sbr.rel (%p125) target = $region16
        $region15: #{tpu_custom_call.1} parent=11 // pred_region
          %s129 = ssub.s32 128, 128
          %130 = vsyncadd [#allocation6], %s129
          %s132 = sshll.u32 [#allocation5], 4
          %s133 = int_to_ptr.vmem [resolvable:$true] %s132
          %135 = dma.hbm_to_vmem [thread:$0]  %s1, 128, %s133, [#allocation6]
        $region16: #{tpu_custom_call.1} parent=11 // pred_fallthru
          _
        // Predicated region
        $region17: #{tpu_custom_call.1} parent=11 // pred_check
          %p136 = pneg %p84
        $region18: #{tpu_custom_call.1} parent=11 // pred_check_branch
          %138 = sbr.rel (%p136) target = $region20
        $region19: #{tpu_custom_call.1} parent=11 // pred_region
          %s140 = ssub.s32 128, 128
          %141 = vsyncadd [#allocation6], %s140
          %s143 = sshll.u32 [#allocation7], 4
          %s144 = int_to_ptr.vmem [resolvable:$true] %s143
          %146 = dma.hbm_to_vmem [thread:$0]  %s2, 128, %s144, [#allocation6]
        $region20: #{tpu_custom_call.1} parent=11 // pred_fallthru
          _
      $region12: #{tpu_custom_call.1} parent=5 // pred_fallthru
        _
      %p147 = scmp.lt.s32.totalorder %s16, 2
      // Predicated region
      $region21: #{tpu_custom_call.1} parent=5 // pred_check
        %p148 = pneg %p147
      $region22: #{tpu_custom_call.1} parent=5 // pred_check_branch
        %150 = sbr.rel (%p148) target = $region24
      $region23: #{tpu_custom_call.1} parent=5 // pred_region
        // Predicated region
        $region25: #{tpu_custom_call.1} parent=23 // pred_check
          %p151 = pneg %p36
        $region26: #{tpu_custom_call.1} parent=23 // pred_check_branch
          %153 = sbr.rel (%p151) target = $region28
        $region27: #{tpu_custom_call.1} parent=23 // pred_region
          %s154 = sand.u32 %s26, 1
          %s155 = scalar_lea.sflag [#allocation3], %s154
          %s156 = sand.u32 %s26, 1
          %s157 = smul.addr %s156, 16
          %s158 = scalar_lea.vmem [#allocation2], %s157
          %s160 = ssub.s32 256, 256
          %161 = vsyncadd %s155, %s160
          %s162 = smul.addr %s16, 2
          %s163 = smul.addr %s162, 128
          %s164 = scalar_lea.hbm %s0, %s163
          %s166 = sshll.u32 %s158, 4
          %s167 = int_to_ptr.vmem [resolvable:$true] %s166
          %169 = dma.hbm_to_vmem [thread:$0]  %s164, 256, %s167, %s155
        $region28: #{tpu_custom_call.1} parent=23 // pred_fallthru
          _
      $region24: #{tpu_custom_call.1} parent=5 // pred_fallthru
        _
      %p170 = scmp.le.s32.totalorder 1, %s16
      %p171 = scmp.lt.s32.totalorder %s16, 3
      %p172 = pnand %p170, %p171
      %p173 = pneg %p172
      // Predicated region
      $region29: #{tpu_custom_call.1} parent=5 // pred_check
        _
      $region30: #{tpu_custom_call.1} parent=5 // pred_check_branch
        %175 = sbr.rel (%p172) target = $region32
      $region31: #{tpu_custom_call.1} parent=5 // pred_region
        %s176 = ssub.s32 %s16, 1
        %s177 = sand.u32 %s29, 1
        %s178 = scalar_lea.sflag [#allocation3], %s177
        %s179 = sand.u32 %s29, 1
        %s180 = smul.addr %s179, 16
        %s181 = scalar_lea.vmem [#allocation2], %s180
        // Predicated region
        $region33: #{tpu_custom_call.1} parent=31 // pred_check
          %p182 = pneg %p42
        $region34: #{tpu_custom_call.1} parent=31 // pred_check_branch
          %184 = sbr.rel (%p182) target = $region36
        $region35: #{tpu_custom_call.1} parent=31 // pred_region
          %185 = dma.done %s178, 256
        $region36: #{tpu_custom_call.1} parent=31 // pred_fallthru
          _
        // Predicated region
        $region37: #{tpu_custom_call.1} parent=31 // pred_check
          %p186 = pneg %p63
        $region38: #{tpu_custom_call.1} parent=31 // pred_check_branch
          %188 = sbr.rel (%p186) target = $region40
        $region39: #{tpu_custom_call.1} parent=31 // pred_region
          %189 = dma.done [#allocation6], 128
        $region40: #{tpu_custom_call.1} parent=31 // pred_fallthru
          _
        // Predicated region
        $region41: #{tpu_custom_call.1} parent=31 // pred_check
          %p190 = pneg %p84
        $region42: #{tpu_custom_call.1} parent=31 // pred_check_branch
          %192 = sbr.rel (%p190) target = $region44
        $region43: #{tpu_custom_call.1} parent=31 // pred_region
          %193 = dma.done [#allocation6], 128
        $region44: #{tpu_custom_call.1} parent=31 // pred_fallthru
          _
        %s194 = sand.u32 %s29, 1
        %s195 = scalar_lea.sflag [#allocation3], %s194
        %s196 = sand.u32 %s29, 1
        %s197 = smul.addr %s196, 16
        %s198 = scalar_lea.vmem [#allocation2], %s197
        %p199 = pneg %p42
        %p200 = pneg %p39
        %p201 = pneg %p63
        %p202 = pneg %p60
        %p203 = pneg %p84
        %p204 = pneg %p81
        %p205 = pneg %p110
        %p206 = pneg %p107
        %s207 = sand.u32 %s97, 1
        %s208 = scalar_lea.sflag [#allocation4], %s207
        %s209 = sand.u32 %s97, 1
        %s210 = smul.addr %s209, 16
        %s211 = scalar_lea.vmem [#allocation8], %s210
        %v212 = vld [vmem:[%s181] sm:$0xff]
        %v213 = vld [vmem:[%s181 + $0x8] sm:$0xff]
        %v214 = vadd.f32 %v212, %v213
        %215 = vadd.xlane.f32.xlu0 %v214
        %v216 = vpop.xlane.xlu0 %215
        %v217 = vmul.f32 %v216, 0.00390625
        %v218 = vld [vmem:[#allocation5] sm:$0xff]
        %v219 = vmul.f32 %v218, %v217
        %vm220 = vcmask 64512
        %v221 = vsel %vm220, %v219, 0.0
        %v222 = vrot.slane %v221, 4
        %v223 = vadd.f32 %v221, %v222
        %v224 = vrot.slane %v223, 2
        %v225 = vadd.f32 %v223, %v224
        %v226 = vrot.slane %v225, 1
        %v227 = vadd.f32 %v225, %v226
        %v228 = vmax.f32 %v227, 0.0
        %v229 = vld [vmem:[#allocation7] sm:$0xff]
        %v230 = vmul.f32 %v229, %v228
        %v231 = vsel %vm220, %v230, 0.0
        %232 = vadd.xlane.f32.xlu0 %v231
        %v233 = vpop.xlane.xlu0 %232
        %v234 = vadd.f32 %v233, 3.0
        %v235 = vmax.f32 %v234, 0.0
        %v236 = vmin.f32 %v235, 6.0
        %v237 = vmul.f32 %v236, 0.16666667
        %v238 = vmul.f32 %v212, %v237
        %v239 = vmul.f32 %v213, %v237
        %240 = vst [vmem:[%s211] sm:$0xff] %v238
        %241 = vst [vmem:[%s211 + $0x8] sm:$0xff] %v239
        %s242 = sand.u32 %s97, 1
        %s243 = scalar_lea.sflag [#allocation4], %s242
        %s244 = sand.u32 %s97, 1
        %s245 = smul.addr %s244, 16
        %s246 = scalar_lea.vmem [#allocation8], %s245
        // Predicated region
        $region45: #{tpu_custom_call.1} parent=31 // pred_check
          %p247 = pneg %p107
        $region46: #{tpu_custom_call.1} parent=31 // pred_check_branch
          %249 = sbr.rel (%p247) target = $region48
        $region47: #{tpu_custom_call.1} parent=31 // pred_region
          %s251 = ssub.s32 256, 256
          %252 = vsyncadd %s243, %s251
          %s253 = smul.addr %s21, 2
          %s254 = smul.addr %s253, 128
          %s255 = scalar_lea.hbm %s3, %s254
          %s257 = sshll.u32 %s246, 4
          %s258 = int_to_ptr.vmem [resolvable:$true] %s257
          %260 = dma.vmem_to_hbm [thread:$0]  %s258, 256, %s255, %s243
        $region48: #{tpu_custom_call.1} parent=31 // pred_fallthru
          _
      $region32: #{tpu_custom_call.1} parent=5 // pred_fallthru
        _
      %p261 = scmp.le.s32.totalorder 2, %s16
      // Predicated region
      $region49: #{tpu_custom_call.1} parent=5 // pred_check
        %p262 = pneg %p261
      $region50: #{tpu_custom_call.1} parent=5 // pred_check_branch
        %264 = sbr.rel (%p262) target = $region52
      $region51: #{tpu_custom_call.1} parent=5 // pred_region
        %s265 = ssub.s32 %s16, 2
        // Predicated region
        $region53: #{tpu_custom_call.1} parent=51 // pred_check
          %p266 = pneg %p113
        $region54: #{tpu_custom_call.1} parent=51 // pred_check_branch
          %268 = sbr.rel (%p266) target = $region56
        $region55: #{tpu_custom_call.1} parent=51 // pred_region
          %s269 = sand.u32 %s98, 1
          %s270 = scalar_lea.sflag [#allocation4], %s269
          %s271 = sand.u32 %s98, 1
          %s272 = smul.addr %s271, 16
          %s273 = scalar_lea.vmem [#allocation8], %s272
          %274 = dma.done %s270, 256
        $region56: #{tpu_custom_call.1} parent=51 // pred_fallthru
          _
      $region52: #{tpu_custom_call.1} parent=5 // pred_fallthru
        _
    $region6: #{tpu_custom_call.1} parent=1 // loop_footer
      %s20 = sadd.s32 1, %s16
    $region7: #{tpu_custom_call.1} parent=1 // loop_footer_branch
      %15 = sbr.rel target = $region3
    $region8: #{tpu_custom_call.1} parent=1 // loop_exit
      _
    %275 = vsyncpa [#allocation3], 1
    %s276 = scalar_lea.sflag [#allocation3], 1
    %277 = vsyncpa %s276, 1
    %278 = vsyncpa [#allocation6], 1
    %279 = vsyncpa [#allocation4], 1
    %s280 = scalar_lea.sflag [#allocation4], 1
    %281 = vsyncpa %s280, 1

</llo_original>
